<compile_context>
chip_gen: v5e
topology: v5e:2x2
jax: 0.10.0
libtpu: 0.0.40
codegen_flags: <defaults>
</compile_context>

<pallas_src>
import jax
import jax.numpy as jnp
from jax.experimental import pallas as pl
from jax.experimental.pallas import tpu as pltpu

EPS = 1e-5

# ---------------- model hyper-params (small, consistent with the module) ----
FIELD_DIMS = (10, 20, 30, 40)     # args.field_dims
NUM_FIELDS = len(FIELD_DIMS)      # F = 4
EMBED_DIM  = 16                   # args.embed_dim
MLP_DIMS   = (32, 16)             # args.mlp_dims
BATCH      = 8

# Field offsets are static config -> baked into the kernel as Python ints.
_off = [0]
for _d in FIELD_DIMS[:-1]:
    _off.append(_off[-1] + _d)
OFFSETS = tuple(_off)             # (0, 10, 30, 60)


# ---------------- Pallas kernel: gather -> [Linear+ReLU]x2 -> head ----------
def mlp_kernel(idx_ref, emb_ref, w1f_ref, w2_ref, pk_ref, o_ref, x_ref):
    # idx_ref : (B, F)   int32, SMEM      raw field indices
    # emb_ref : (V, D)   f32,   VMEM      full embedding table
    # w1f_ref : (F, D, H1) bf16, VMEM     BN-folded, row-permuted W1 per field
    # w2_ref  : (H1, H2) bf16,  VMEM      BN-folded W2
    # pk_ref  : (1, 128) f32,   VMEM      packed [b1 | b2 | wo | bo]
    # o_ref   : (B, 1)   f32,   VMEM
    # x_ref   : (F, B, D) f32 scratch     gathered embeddings
    F_, B_, D_ = x_ref.shape
    H1 = w1f_ref.shape[2]
    H2 = w2_ref.shape[1]

    # --- fused embedding gather: x[f, b, :] = emb[field[b,f] + offset[f]] ---
    for f in range(F_):
        for b in range(B_):
            x_ref[f, b, :] = emb_ref[idx_ref[b, f] + OFFSETS[f], :]

    # --- layer 1: emb-BN + Linear + BN1 all pre-folded into W1/b1, ReLU -----
    h = jnp.zeros((B_, H1), jnp.float32)
    for f in range(F_):
        h = h + jnp.dot(x_ref[f].astype(jnp.bfloat16), w1f_ref[f],
                        preferred_element_type=jnp.float32)
    b1 = pk_ref[:, 0:H1]                                   # (1, H1)
    h = jnp.maximum(h + b1, 0.0)

    # --- layer 2: Linear + BN2 pre-folded, ReLU -----------------------------
    h = jnp.dot(h.astype(jnp.bfloat16), w2_ref[...],
                preferred_element_type=jnp.float32)
    b2 = pk_ref[:, H1:H1 + H2]                             # (1, H2)
    h = jnp.maximum(h + b2, 0.0)

    # --- output head (N=1): VPU multiply + lane reduce instead of an N=1
    #     MXU matmul, then sigmoid (EUP) -------------------------------------
    wo = pk_ref[:, H1 + H2:H1 + 2 * H2]                    # (1, H2)
    bo = pk_ref[:, H1 + 2 * H2:H1 + 2 * H2 + 1]            # (1, 1)
    logit = jnp.sum(h * wo, axis=-1, keepdims=True) + bo   # (B, 1)
    o_ref[...] = jax.nn.sigmoid(logit)


def mlp_pallas(field, emb, w1f, w2, pk):
    """Single fused dispatch: gather + MLP + sigmoid. No grid (tiny shapes)."""
    B = field.shape[0]
    F_, D_, H1 = w1f.shape
    H2 = w2.shape[1]
    args = (field, emb, w1f, w2, pk)

    flops = 2 * B * (F_ * D_ * H1 + H1 * H2 + H2)
    bytes_accessed = int(sum(a.size * a.dtype.itemsize for a in args) + B * 4)

    out = pl.pallas_call(
        mlp_kernel,
        out_shape=jax.ShapeDtypeStruct((B, 1), jnp.float32),
        in_specs=[
            pl.BlockSpec(memory_space=pltpu.MemorySpace.SMEM),   # field idx
            pl.BlockSpec(memory_space=pltpu.MemorySpace.VMEM),   # emb table
            pl.BlockSpec(memory_space=pltpu.MemorySpace.VMEM),   # W1 (F,D,H1)
            pl.BlockSpec(memory_space=pltpu.MemorySpace.VMEM),   # W2 (H1,H2)
            pl.BlockSpec(memory_space=pltpu.MemorySpace.VMEM),   # packed biases/head
        ],
        out_specs=pl.BlockSpec(memory_space=pltpu.MemorySpace.VMEM),
        scratch_shapes=[pltpu.VMEM((F_, B, D_), jnp.float32)],
        cost_estimate=pl.CostEstimate(flops=flops, transcendentals=B,
                                      bytes_accessed=bytes_accessed),
    )(*args)
    return out[:, 0]                                        # squeeze(1)


# ---------------- parameter construction (deterministic) --------------------
def make_params(key):
    ks = jax.random.split(key, 16)
    V = sum(FIELD_DIMS)
    D = EMBED_DIM
    F = NUM_FIELDS
    in_dim = F * D

    # EMB: xavier-uniform embedding table + field offsets
    bound = (6.0 / (V + D)) ** 0.5
    emb = jax.random.uniform(ks[0], (V, D), jnp.float32, -bound, bound)
    offsets = jnp.array(OFFSETS, jnp.int32)

    def bn_params(k, n):
        a, b, c, d = jax.random.split(k, 4)
        gamma = 1.0 + 0.1 * jax.random.normal(a, (n,), jnp.float32)
        beta = 0.1 * jax.random.normal(b, (n,), jnp.float32)
        mean = 0.05 * jax.random.normal(c, (n,), jnp.float32)
        var = 0.5 + 0.1 * jnp.abs(jax.random.normal(d, (n,), jnp.float32))
        return gamma, beta, mean, var

    def linear_params(k, n_in, n_out):
        a, b = jax.random.split(k)
        lim = 1.0 / (n_in ** 0.5)
        w = jax.random.uniform(a, (n_in, n_out), jnp.float32, -lim, lim)
        bia = jax.random.uniform(b, (n_out,), jnp.float32, -lim, lim)
        return w, bia

    bn_emb = bn_params(ks[1], D)                   # self.BN (embed_dim channels)
    w1, b1 = linear_params(ks[2], in_dim, MLP_DIMS[0])
    bn1 = bn_params(ks[3], MLP_DIMS[0])
    w2, b2 = linear_params(ks[4], MLP_DIMS[0], MLP_DIMS[1])
    bn2 = bn_params(ks[5], MLP_DIMS[1])
    wo, bo = linear_params(ks[6], MLP_DIMS[1], 1)

    return dict(emb=emb, offsets=offsets, bn_emb=bn_emb,
                w1=w1, b1=b1, bn1=bn1, w2=w2, b2=b2, bn2=bn2,
                wo=wo, bo=bo)


def fold_bn(gamma, beta, mean, var):
    s = gamma / jnp.sqrt(var + EPS)
    t = beta - mean * s
    return s, t


# ------ one-time param prep: fold BNs, permute/reshape W1, pack, cast -------
def prepare_params(P):
    """Fold every BatchNorm affine into the adjacent Linear, permute W1's rows
    so the kernel consumes the natural per-field order (f, d) instead of
    torch's transpose(1,2)+flatten order (d*F + f), reshape W1 to per-field
    (F, D, H1) blocks, pack b1/b2/wo/bo into a single (1,128) row, and cast
    the matmul weights to bf16 (accumulation stays f32)."""
    F, D = NUM_FIELDS, EMBED_DIM
    H1, H2 = MLP_DIMS

    # perm[f*D + d] = d*F + f  (new flat index -> old torch flat index)
    perm = (jnp.arange(D)[None, :] * F + jnp.arange(F)[:, None]).reshape(-1)
    w1 = P["w1"][perm]                           # rows now in f*D+d order

    # embedding BatchNorm1d (per embed-dim channel d): x' = x*es + eb
    g, b, m, v = P["bn_emb"]
    es_d = g / jnp.sqrt(v + EPS)
    eb_d = b - m * es_d
    es = jnp.tile(es_d, F)                       # entry at f*D+d == es_d[d]
    eb = jnp.tile(eb_d, F)
    b1 = P["b1"] + eb @ w1                       # absorb eb BEFORE scaling rows
    w1 = w1 * es[:, None]                        # absorb es into W1 rows

    # BN after layer 1 -> W1 columns / b1
    s1, t1 = fold_bn(*P["bn1"])
    w1 = w1 * s1[None, :]
    b1 = b1 * s1 + t1

    # BN after layer 2 -> W2 columns / b2
    s2, t2 = fold_bn(*P["bn2"])
    w2 = P["w2"] * s2[None, :]
    b2 = P["b2"] * s2 + t2

    # Packed (1,128) f32 row: [0:H1)=b1 | [H1:H1+H2)=b2 | [H1+H2:H1+2H2)=wo | [H1+2H2]=bo
    pk = jnp.zeros((128,), jnp.float32)
    pk = pk.at[0:H1].set(b1)
    pk = pk.at[H1:H1 + H2].set(b2)
    pk = pk.at[H1 + H2:H1 + 2 * H2].set(P["wo"][:, 0])
    pk = pk.at[H1 + 2 * H2].set(P["bo"][0])
    pk = pk.reshape(1, 128)

    return dict(
        emb=P["emb"],                                    # (V, D) f32, gathered in-kernel
        w1f=w1.reshape(F, D, H1).astype(jnp.bfloat16),   # per-field W1 blocks
        w2=w2.astype(jnp.bfloat16),
        pk=pk,
    )


# ---------------- full forward: ONE fused Pallas dispatch -------------------
def forward(field, PP):
    return mlp_pallas(field, PP["emb"], PP["w1f"], PP["w2"], PP["pk"])


# ---------------- pure-JAX f32 reference (for correctness check) ------------
def ref_forward(field, P):
    idx = field + P["offsets"][None, :]
    e = P["emb"][idx]                              # (B, F, D)
    e = jnp.transpose(e, (0, 2, 1))                # (B, D, F)  == torch .transpose(1,2)
    g, b, m, v = P["bn_emb"]
    e = (e - m[None, :, None]) / jnp.sqrt(v[None, :, None] + EPS) \
        * g[None, :, None] + b[None, :, None]
    h = e.reshape(e.shape[0], -1).astype(jnp.float32)
    for (w, bia, bn) in ((P["w1"], P["b1"], P["bn1"]),
                         (P["w2"], P["b2"], P["bn2"])):
        h = h @ w + bia
        gg, bb, mm, vv = bn
        h = (h - mm) / jnp.sqrt(vv + EPS) * gg + bb
        h = jnp.maximum(h, 0.0)
    out = h @ P["wo"] + P["bo"]
    return jax.nn.sigmoid(out[:, 0])


if __name__ == "__main__":
    key = jax.random.PRNGKey(0)
    kp, kx = jax.random.split(key)
    P = make_params(kp)
    PP = prepare_params(P)        # one-time: BN folding + W1 permute + pack + bf16

    # Long tensor (batch, num_fields); each field index within its vocabulary.
    field = jax.random.randint(
        kx, (BATCH, NUM_FIELDS), 0,
        jnp.array(FIELD_DIMS, jnp.int32)).astype(jnp.int32)

    out = jax.block_until_ready(jax.jit(forward)(field, PP))
    ref = jax.block_until_ready(ref_forward(field, P))

    assert out.shape == (BATCH,), out.shape
    # bf16 matmul weights vs f32 reference -> relaxed tolerance (per review).
    assert jnp.allclose(out, ref, atol=1e-2, rtol=1e-2), (out, ref)
    print("KERNEL_OK")
</pallas_src>

<mosaic_0001>
module attributes {stable_mosaic.version = 11 : i64} {
  func.func @mlp_kernel(%arg0: memref<8x4xi32, #tpu.memory_space<smem>>, %arg1: memref<100x16xf32, #tpu.memory_space<vmem>>, %arg2: memref<4x16x32xbf16, #tpu.memory_space<vmem>>, %arg3: memref<32x16xbf16, #tpu.memory_space<vmem>>, %arg4: memref<1x128xf32, #tpu.memory_space<vmem>>, %arg5: memref<8x1xf32, #tpu.memory_space<vmem>>, %arg6: memref<4x8x16xf32, #tpu.memory_space<vmem>>) attributes {dimension_semantics = [], scalar_prefetch = 0 : i64, scratch_operands = 1 : i64, tpu.core_type = #tpu.core_type<tc>} {
    %c0 = arith.constant 0 : index
    %c0_0 = arith.constant 0 : index
    %0 = memref.load %arg0[%c0, %c0_0] : memref<8x4xi32, #tpu.memory_space<smem>>
    %c0_i32 = arith.constant 0 : i32
    %1 = arith.addi %0, %c0_i32 : i32
    %2 = arith.index_cast %1 : i32 to index
    %c0_1 = arith.constant 0 : index
    %3 = vector.load %arg1[%2, %c0_1] : memref<100x16xf32, #tpu.memory_space<vmem>>, vector<1x16xf32>
    %4 = vector.shape_cast %3 : vector<1x16xf32> to vector<16xf32>
    %c0_2 = arith.constant 0 : index
    %c0_3 = arith.constant 0 : index
    %c0_4 = arith.constant 0 : index
    %5 = vector.load %arg6[%c0_2, %c0_3, %c0_4] : memref<4x8x16xf32, #tpu.memory_space<vmem>>, vector<1x1x16xf32>
    %6 = vector.shape_cast %5 : vector<1x1x16xf32> to vector<16xf32>
    %7 = vector.shape_cast %4 : vector<16xf32> to vector<1x1x16xf32>
    tpu.vector_store %arg6[%c0_2, %c0_3, %c0_4], %7 {strides = array<i32>} : memref<4x8x16xf32, #tpu.memory_space<vmem>>, vector<1x1x16xf32>,
    %c1 = arith.constant 1 : index
    %c0_5 = arith.constant 0 : index
    %8 = memref.load %arg0[%c1, %c0_5] : memref<8x4xi32, #tpu.memory_space<smem>>
    %c0_i32_6 = arith.constant 0 : i32
    %9 = arith.addi %8, %c0_i32_6 : i32
    %10 = arith.index_cast %9 : i32 to index
    %c0_7 = arith.constant 0 : index
    %11 = vector.load %arg1[%10, %c0_7] : memref<100x16xf32, #tpu.memory_space<vmem>>, vector<1x16xf32>
    %12 = vector.shape_cast %11 : vector<1x16xf32> to vector<16xf32>
    %c0_8 = arith.constant 0 : index
    %c1_9 = arith.constant 1 : index
    %c0_10 = arith.constant 0 : index
    %13 = vector.load %arg6[%c0_8, %c1_9, %c0_10] : memref<4x8x16xf32, #tpu.memory_space<vmem>>, vector<1x1x16xf32>
    %14 = vector.shape_cast %13 : vector<1x1x16xf32> to vector<16xf32>
    %15 = vector.shape_cast %12 : vector<16xf32> to vector<1x1x16xf32>
    tpu.vector_store %arg6[%c0_8, %c1_9, %c0_10], %15 {strides = array<i32>} : memref<4x8x16xf32, #tpu.memory_space<vmem>>, vector<1x1x16xf32>,
    %c2 = arith.constant 2 : index
    %c0_11 = arith.constant 0 : index
    %16 = memref.load %arg0[%c2, %c0_11] : memref<8x4xi32, #tpu.memory_space<smem>>
    %c0_i32_12 = arith.constant 0 : i32
    %17 = arith.addi %16, %c0_i32_12 : i32
    %18 = arith.index_cast %17 : i32 to index
    %c0_13 = arith.constant 0 : index
    %19 = vector.load %arg1[%18, %c0_13] : memref<100x16xf32, #tpu.memory_space<vmem>>, vector<1x16xf32>
    %20 = vector.shape_cast %19 : vector<1x16xf32> to vector<16xf32>
    %c0_14 = arith.constant 0 : index
    %c2_15 = arith.constant 2 : index
    %c0_16 = arith.constant 0 : index
    %21 = vector.load %arg6[%c0_14, %c2_15, %c0_16] : memref<4x8x16xf32, #tpu.memory_space<vmem>>, vector<1x1x16xf32>
    %22 = vector.shape_cast %21 : vector<1x1x16xf32> to vector<16xf32>
    %23 = vector.shape_cast %20 : vector<16xf32> to vector<1x1x16xf32>
    tpu.vector_store %arg6[%c0_14, %c2_15, %c0_16], %23 {strides = array<i32>} : memref<4x8x16xf32, #tpu.memory_space<vmem>>, vector<1x1x16xf32>,
    %c3 = arith.constant 3 : index
    %c0_17 = arith.constant 0 : index
    %24 = memref.load %arg0[%c3, %c0_17] : memref<8x4xi32, #tpu.memory_space<smem>>
    %c0_i32_18 = arith.constant 0 : i32
    %25 = arith.addi %24, %c0_i32_18 : i32
    %26 = arith.index_cast %25 : i32 to index
    %c0_19 = arith.constant 0 : index
    %27 = vector.load %arg1[%26, %c0_19] : memref<100x16xf32, #tpu.memory_space<vmem>>, vector<1x16xf32>
    %28 = vector.shape_cast %27 : vector<1x16xf32> to vector<16xf32>
    %c0_20 = arith.constant 0 : index
    %c3_21 = arith.constant 3 : index
    %c0_22 = arith.constant 0 : index
    %29 = vector.load %arg6[%c0_20, %c3_21, %c0_22] : memref<4x8x16xf32, #tpu.memory_space<vmem>>, vector<1x1x16xf32>
    %30 = vector.shape_cast %29 : vector<1x1x16xf32> to vector<16xf32>
    %31 = vector.shape_cast %28 : vector<16xf32> to vector<1x1x16xf32>
    tpu.vector_store %arg6[%c0_20, %c3_21, %c0_22], %31 {strides = array<i32>} : memref<4x8x16xf32, #tpu.memory_space<vmem>>, vector<1x1x16xf32>,
    %c4 = arith.constant 4 : index
    %c0_23 = arith.constant 0 : index
    %32 = memref.load %arg0[%c4, %c0_23] : memref<8x4xi32, #tpu.memory_space<smem>>
    %c0_i32_24 = arith.constant 0 : i32
    %33 = arith.addi %32, %c0_i32_24 : i32
    %34 = arith.index_cast %33 : i32 to index
    %c0_25 = arith.constant 0 : index
    %35 = vector.load %arg1[%34, %c0_25] : memref<100x16xf32, #tpu.memory_space<vmem>>, vector<1x16xf32>
    %36 = vector.shape_cast %35 : vector<1x16xf32> to vector<16xf32>
    %c0_26 = arith.constant 0 : index
    %c4_27 = arith.constant 4 : index
    %c0_28 = arith.constant 0 : index
    %37 = vector.load %arg6[%c0_26, %c4_27, %c0_28] : memref<4x8x16xf32, #tpu.memory_space<vmem>>, vector<1x1x16xf32>
    %38 = vector.shape_cast %37 : vector<1x1x16xf32> to vector<16xf32>
    %39 = vector.shape_cast %36 : vector<16xf32> to vector<1x1x16xf32>
    tpu.vector_store %arg6[%c0_26, %c4_27, %c0_28], %39 {strides = array<i32>} : memref<4x8x16xf32, #tpu.memory_space<vmem>>, vector<1x1x16xf32>,
    %c5 = arith.constant 5 : index
    %c0_29 = arith.constant 0 : index
    %40 = memref.load %arg0[%c5, %c0_29] : memref<8x4xi32, #tpu.memory_space<smem>>
    %c0_i32_30 = arith.constant 0 : i32
    %41 = arith.addi %40, %c0_i32_30 : i32
    %42 = arith.index_cast %41 : i32 to index
    %c0_31 = arith.constant 0 : index
    %43 = vector.load %arg1[%42, %c0_31] : memref<100x16xf32, #tpu.memory_space<vmem>>, vector<1x16xf32>
    %44 = vector.shape_cast %43 : vector<1x16xf32> to vector<16xf32>
    %c0_32 = arith.constant 0 : index
    %c5_33 = arith.constant 5 : index
    %c0_34 = arith.constant 0 : index
    %45 = vector.load %arg6[%c0_32, %c5_33, %c0_34] : memref<4x8x16xf32, #tpu.memory_space<vmem>>, vector<1x1x16xf32>
    %46 = vector.shape_cast %45 : vector<1x1x16xf32> to vector<16xf32>
    %47 = vector.shape_cast %44 : vector<16xf32> to vector<1x1x16xf32>
    tpu.vector_store %arg6[%c0_32, %c5_33, %c0_34], %47 {strides = array<i32>} : memref<4x8x16xf32, #tpu.memory_space<vmem>>, vector<1x1x16xf32>,
    %c6 = arith.constant 6 : index
    %c0_35 = arith.constant 0 : index
    %48 = memref.load %arg0[%c6, %c0_35] : memref<8x4xi32, #tpu.memory_space<smem>>
    %c0_i32_36 = arith.constant 0 : i32
    %49 = arith.addi %48, %c0_i32_36 : i32
    %50 = arith.index_cast %49 : i32 to index
    %c0_37 = arith.constant 0 : index
    %51 = vector.load %arg1[%50, %c0_37] : memref<100x16xf32, #tpu.memory_space<vmem>>, vector<1x16xf32>
    %52 = vector.shape_cast %51 : vector<1x16xf32> to vector<16xf32>
    %c0_38 = arith.constant 0 : index
    %c6_39 = arith.constant 6 : index
    %c0_40 = arith.constant 0 : index
    %53 = vector.load %arg6[%c0_38, %c6_39, %c0_40] : memref<4x8x16xf32, #tpu.memory_space<vmem>>, vector<1x1x16xf32>
    %54 = vector.shape_cast %53 : vector<1x1x16xf32> to vector<16xf32>
    %55 = vector.shape_cast %52 : vector<16xf32> to vector<1x1x16xf32>
    tpu.vector_store %arg6[%c0_38, %c6_39, %c0_40], %55 {strides = array<i32>} : memref<4x8x16xf32, #tpu.memory_space<vmem>>, vector<1x1x16xf32>,
    %c7 = arith.constant 7 : index
    %c0_41 = arith.constant 0 : index
    %56 = memref.load %arg0[%c7, %c0_41] : memref<8x4xi32, #tpu.memory_space<smem>>
    %c0_i32_42 = arith.constant 0 : i32
    %57 = arith.addi %56, %c0_i32_42 : i32
    %58 = arith.index_cast %57 : i32 to index
    %c0_43 = arith.constant 0 : index
    %59 = vector.load %arg1[%58, %c0_43] : memref<100x16xf32, #tpu.memory_space<vmem>>, vector<1x16xf32>
    %60 = vector.shape_cast %59 : vector<1x16xf32> to vector<16xf32>
    %c0_44 = arith.constant 0 : index
    %c7_45 = arith.constant 7 : index
    %c0_46 = arith.constant 0 : index
    %61 = vector.load %arg6[%c0_44, %c7_45, %c0_46] : memref<4x8x16xf32, #tpu.memory_space<vmem>>, vector<1x1x16xf32>
    %62 = vector.shape_cast %61 : vector<1x1x16xf32> to vector<16xf32>
    %63 = vector.shape_cast %60 : vector<16xf32> to vector<1x1x16xf32>
    tpu.vector_store %arg6[%c0_44, %c7_45, %c0_46], %63 {strides = array<i32>} : memref<4x8x16xf32, #tpu.memory_space<vmem>>, vector<1x1x16xf32>,
    %c0_47 = arith.constant 0 : index
    %c1_48 = arith.constant 1 : index
    %64 = memref.load %arg0[%c0_47, %c1_48] : memref<8x4xi32, #tpu.memory_space<smem>>
    %c10_i32 = arith.constant 10 : i32
    %65 = arith.addi %64, %c10_i32 : i32
    %66 = arith.index_cast %65 : i32 to index
    %c0_49 = arith.constant 0 : index
    %67 = vector.load %arg1[%66, %c0_49] : memref<100x16xf32, #tpu.memory_space<vmem>>, vector<1x16xf32>
    %68 = vector.shape_cast %67 : vector<1x16xf32> to vector<16xf32>
    %c1_50 = arith.constant 1 : index
    %c0_51 = arith.constant 0 : index
    %c0_52 = arith.constant 0 : index
    %69 = vector.load %arg6[%c1_50, %c0_51, %c0_52] : memref<4x8x16xf32, #tpu.memory_space<vmem>>, vector<1x1x16xf32>
    %70 = vector.shape_cast %69 : vector<1x1x16xf32> to vector<16xf32>
    %71 = vector.shape_cast %68 : vector<16xf32> to vector<1x1x16xf32>
    tpu.vector_store %arg6[%c1_50, %c0_51, %c0_52], %71 {strides = array<i32>} : memref<4x8x16xf32, #tpu.memory_space<vmem>>, vector<1x1x16xf32>,
    %c1_53 = arith.constant 1 : index
    %c1_54 = arith.constant 1 : index
    %72 = memref.load %arg0[%c1_53, %c1_54] : memref<8x4xi32, #tpu.memory_space<smem>>
    %c10_i32_55 = arith.constant 10 : i32
    %73 = arith.addi %72, %c10_i32_55 : i32
    %74 = arith.index_cast %73 : i32 to index
    %c0_56 = arith.constant 0 : index
    %75 = vector.load %arg1[%74, %c0_56] : memref<100x16xf32, #tpu.memory_space<vmem>>, vector<1x16xf32>
    %76 = vector.shape_cast %75 : vector<1x16xf32> to vector<16xf32>
    %c1_57 = arith.constant 1 : index
    %c1_58 = arith.constant 1 : index
    %c0_59 = arith.constant 0 : index
    %77 = vector.load %arg6[%c1_57, %c1_58, %c0_59] : memref<4x8x16xf32, #tpu.memory_space<vmem>>, vector<1x1x16xf32>
    %78 = vector.shape_cast %77 : vector<1x1x16xf32> to vector<16xf32>
    %79 = vector.shape_cast %76 : vector<16xf32> to vector<1x1x16xf32>
    tpu.vector_store %arg6[%c1_57, %c1_58, %c0_59], %79 {strides = array<i32>} : memref<4x8x16xf32, #tpu.memory_space<vmem>>, vector<1x1x16xf32>,
    %c2_60 = arith.constant 2 : index
    %c1_61 = arith.constant 1 : index
    %80 = memref.load %arg0[%c2_60, %c1_61] : memref<8x4xi32, #tpu.memory_space<smem>>
    %c10_i32_62 = arith.constant 10 : i32
    %81 = arith.addi %80, %c10_i32_62 : i32
    %82 = arith.index_cast %81 : i32 to index
    %c0_63 = arith.constant 0 : index
    %83 = vector.load %arg1[%82, %c0_63] : memref<100x16xf32, #tpu.memory_space<vmem>>, vector<1x16xf32>
    %84 = vector.shape_cast %83 : vector<1x16xf32> to vector<16xf32>
    %c1_64 = arith.constant 1 : index
    %c2_65 = arith.constant 2 : index
    %c0_66 = arith.constant 0 : index
    %85 = vector.load %arg6[%c1_64, %c2_65, %c0_66] : memref<4x8x16xf32, #tpu.memory_space<vmem>>, vector<1x1x16xf32>
    %86 = vector.shape_cast %85 : vector<1x1x16xf32> to vector<16xf32>
    %87 = vector.shape_cast %84 : vector<16xf32> to vector<1x1x16xf32>
    tpu.vector_store %arg6[%c1_64, %c2_65, %c0_66], %87 {strides = array<i32>} : memref<4x8x16xf32, #tpu.memory_space<vmem>>, vector<1x1x16xf32>,
    %c3_67 = arith.constant 3 : index
    %c1_68 = arith.constant 1 : index
    %88 = memref.load %arg0[%c3_67, %c1_68] : memref<8x4xi32, #tpu.memory_space<smem>>
    %c10_i32_69 = arith.constant 10 : i32
    %89 = arith.addi %88, %c10_i32_69 : i32
    %90 = arith.index_cast %89 : i32 to index
    %c0_70 = arith.constant 0 : index
    %91 = vector.load %arg1[%90, %c0_70] : memref<100x16xf32, #tpu.memory_space<vmem>>, vector<1x16xf32>
    %92 = vector.shape_cast %91 : vector<1x16xf32> to vector<16xf32>
    %c1_71 = arith.constant 1 : index
    %c3_72 = arith.constant 3 : index
    %c0_73 = arith.constant 0 : index
    %93 = vector.load %arg6[%c1_71, %c3_72, %c0_73] : memref<4x8x16xf32, #tpu.memory_space<vmem>>, vector<1x1x16xf32>
    %94 = vector.shape_cast %93 : vector<1x1x16xf32> to vector<16xf32>
    %95 = vector.shape_cast %92 : vector<16xf32> to vector<1x1x16xf32>
    tpu.vector_store %arg6[%c1_71, %c3_72, %c0_73], %95 {strides = array<i32>} : memref<4x8x16xf32, #tpu.memory_space<vmem>>, vector<1x1x16xf32>,
    %c4_74 = arith.constant 4 : index
    %c1_75 = arith.constant 1 : index
    %96 = memref.load %arg0[%c4_74, %c1_75] : memref<8x4xi32, #tpu.memory_space<smem>>
    %c10_i32_76 = arith.constant 10 : i32
    %97 = arith.addi %96, %c10_i32_76 : i32
    %98 = arith.index_cast %97 : i32 to index
    %c0_77 = arith.constant 0 : index
    %99 = vector.load %arg1[%98, %c0_77] : memref<100x16xf32, #tpu.memory_space<vmem>>, vector<1x16xf32>
    %100 = vector.shape_cast %99 : vector<1x16xf32> to vector<16xf32>
    %c1_78 = arith.constant 1 : index
    %c4_79 = arith.constant 4 : index
    %c0_80 = arith.constant 0 : index
    %101 = vector.load %arg6[%c1_78, %c4_79, %c0_80] : memref<4x8x16xf32, #tpu.memory_space<vmem>>, vector<1x1x16xf32>
    %102 = vector.shape_cast %101 : vector<1x1x16xf32> to vector<16xf32>
    %103 = vector.shape_cast %100 : vector<16xf32> to vector<1x1x16xf32>
    tpu.vector_store %arg6[%c1_78, %c4_79, %c0_80], %103 {strides = array<i32>} : memref<4x8x16xf32, #tpu.memory_space<vmem>>, vector<1x1x16xf32>,
    %c5_81 = arith.constant 5 : index
    %c1_82 = arith.constant 1 : index
    %104 = memref.load %arg0[%c5_81, %c1_82] : memref<8x4xi32, #tpu.memory_space<smem>>
    %c10_i32_83 = arith.constant 10 : i32
    %105 = arith.addi %104, %c10_i32_83 : i32
    %106 = arith.index_cast %105 : i32 to index
    %c0_84 = arith.constant 0 : index
    %107 = vector.load %arg1[%106, %c0_84] : memref<100x16xf32, #tpu.memory_space<vmem>>, vector<1x16xf32>
    %108 = vector.shape_cast %107 : vector<1x16xf32> to vector<16xf32>
    %c1_85 = arith.constant 1 : index
    %c5_86 = arith.constant 5 : index
    %c0_87 = arith.constant 0 : index
    %109 = vector.load %arg6[%c1_85, %c5_86, %c0_87] : memref<4x8x16xf32, #tpu.memory_space<vmem>>, vector<1x1x16xf32>
    %110 = vector.shape_cast %109 : vector<1x1x16xf32> to vector<16xf32>
    %111 = vector.shape_cast %108 : vector<16xf32> to vector<1x1x16xf32>
    tpu.vector_store %arg6[%c1_85, %c5_86, %c0_87], %111 {strides = array<i32>} : memref<4x8x16xf32, #tpu.memory_space<vmem>>, vector<1x1x16xf32>,
    %c6_88 = arith.constant 6 : index
    %c1_89 = arith.constant 1 : index
    %112 = memref.load %arg0[%c6_88, %c1_89] : memref<8x4xi32, #tpu.memory_space<smem>>
    %c10_i32_90 = arith.constant 10 : i32
    %113 = arith.addi %112, %c10_i32_90 : i32
    %114 = arith.index_cast %113 : i32 to index
    %c0_91 = arith.constant 0 : index
    %115 = vector.load %arg1[%114, %c0_91] : memref<100x16xf32, #tpu.memory_space<vmem>>, vector<1x16xf32>
    %116 = vector.shape_cast %115 : vector<1x16xf32> to vector<16xf32>
    %c1_92 = arith.constant 1 : index
    %c6_93 = arith.constant 6 : index
    %c0_94 = arith.constant 0 : index
    %117 = vector.load %arg6[%c1_92, %c6_93, %c0_94] : memref<4x8x16xf32, #tpu.memory_space<vmem>>, vector<1x1x16xf32>
    %118 = vector.shape_cast %117 : vector<1x1x16xf32> to vector<16xf32>
    %119 = vector.shape_cast %116 : vector<16xf32> to vector<1x1x16xf32>
    tpu.vector_store %arg6[%c1_92, %c6_93, %c0_94], %119 {strides = array<i32>} : memref<4x8x16xf32, #tpu.memory_space<vmem>>, vector<1x1x16xf32>,
    %c7_95 = arith.constant 7 : index
    %c1_96 = arith.constant 1 : index
    %120 = memref.load %arg0[%c7_95, %c1_96] : memref<8x4xi32, #tpu.memory_space<smem>>
    %c10_i32_97 = arith.constant 10 : i32
    %121 = arith.addi %120, %c10_i32_97 : i32
    %122 = arith.index_cast %121 : i32 to index
    %c0_98 = arith.constant 0 : index
    %123 = vector.load %arg1[%122, %c0_98] : memref<100x16xf32, #tpu.memory_space<vmem>>, vector<1x16xf32>
    %124 = vector.shape_cast %123 : vector<1x16xf32> to vector<16xf32>
    %c1_99 = arith.constant 1 : index
    %c7_100 = arith.constant 7 : index
    %c0_101 = arith.constant 0 : index
    %125 = vector.load %arg6[%c1_99, %c7_100, %c0_101] : memref<4x8x16xf32, #tpu.memory_space<vmem>>, vector<1x1x16xf32>
    %126 = vector.shape_cast %125 : vector<1x1x16xf32> to vector<16xf32>
    %127 = vector.shape_cast %124 : vector<16xf32> to vector<1x1x16xf32>
    tpu.vector_store %arg6[%c1_99, %c7_100, %c0_101], %127 {strides = array<i32>} : memref<4x8x16xf32, #tpu.memory_space<vmem>>, vector<1x1x16xf32>,
    %c0_102 = arith.constant 0 : index
    %c2_103 = arith.constant 2 : index
    %128 = memref.load %arg0[%c0_102, %c2_103] : memref<8x4xi32, #tpu.memory_space<smem>>
    %c30_i32 = arith.constant 30 : i32
    %129 = arith.addi %128, %c30_i32 : i32
    %130 = arith.index_cast %129 : i32 to index
    %c0_104 = arith.constant 0 : index
    %131 = vector.load %arg1[%130, %c0_104] : memref<100x16xf32, #tpu.memory_space<vmem>>, vector<1x16xf32>
    %132 = vector.shape_cast %131 : vector<1x16xf32> to vector<16xf32>
    %c2_105 = arith.constant 2 : index
    %c0_106 = arith.constant 0 : index
    %c0_107 = arith.constant 0 : index
    %133 = vector.load %arg6[%c2_105, %c0_106, %c0_107] : memref<4x8x16xf32, #tpu.memory_space<vmem>>, vector<1x1x16xf32>
    %134 = vector.shape_cast %133 : vector<1x1x16xf32> to vector<16xf32>
    %135 = vector.shape_cast %132 : vector<16xf32> to vector<1x1x16xf32>
    tpu.vector_store %arg6[%c2_105, %c0_106, %c0_107], %135 {strides = array<i32>} : memref<4x8x16xf32, #tpu.memory_space<vmem>>, vector<1x1x16xf32>,
    %c1_108 = arith.constant 1 : index
    %c2_109 = arith.constant 2 : index
    %136 = memref.load %arg0[%c1_108, %c2_109] : memref<8x4xi32, #tpu.memory_space<smem>>
    %c30_i32_110 = arith.constant 30 : i32
    %137 = arith.addi %136, %c30_i32_110 : i32
    %138 = arith.index_cast %137 : i32 to index
    %c0_111 = arith.constant 0 : index
    %139 = vector.load %arg1[%138, %c0_111] : memref<100x16xf32, #tpu.memory_space<vmem>>, vector<1x16xf32>
    %140 = vector.shape_cast %139 : vector<1x16xf32> to vector<16xf32>
    %c2_112 = arith.constant 2 : index
    %c1_113 = arith.constant 1 : index
    %c0_114 = arith.constant 0 : index
    %141 = vector.load %arg6[%c2_112, %c1_113, %c0_114] : memref<4x8x16xf32, #tpu.memory_space<vmem>>, vector<1x1x16xf32>
    %142 = vector.shape_cast %141 : vector<1x1x16xf32> to vector<16xf32>
    %143 = vector.shape_cast %140 : vector<16xf32> to vector<1x1x16xf32>
    tpu.vector_store %arg6[%c2_112, %c1_113, %c0_114], %143 {strides = array<i32>} : memref<4x8x16xf32, #tpu.memory_space<vmem>>, vector<1x1x16xf32>,
    %c2_115 = arith.constant 2 : index
    %c2_116 = arith.constant 2 : index
    %144 = memref.load %arg0[%c2_115, %c2_116] : memref<8x4xi32, #tpu.memory_space<smem>>
    %c30_i32_117 = arith.constant 30 : i32
    %145 = arith.addi %144, %c30_i32_117 : i32
    %146 = arith.index_cast %145 : i32 to index
    %c0_118 = arith.constant 0 : index
    %147 = vector.load %arg1[%146, %c0_118] : memref<100x16xf32, #tpu.memory_space<vmem>>, vector<1x16xf32>
    %148 = vector.shape_cast %147 : vector<1x16xf32> to vector<16xf32>
    %c2_119 = arith.constant 2 : index
    %c2_120 = arith.constant 2 : index
    %c0_121 = arith.constant 0 : index
    %149 = vector.load %arg6[%c2_119, %c2_120, %c0_121] : memref<4x8x16xf32, #tpu.memory_space<vmem>>, vector<1x1x16xf32>
    %150 = vector.shape_cast %149 : vector<1x1x16xf32> to vector<16xf32>
    %151 = vector.shape_cast %148 : vector<16xf32> to vector<1x1x16xf32>
    tpu.vector_store %arg6[%c2_119, %c2_120, %c0_121], %151 {strides = array<i32>} : memref<4x8x16xf32, #tpu.memory_space<vmem>>, vector<1x1x16xf32>,
    %c3_122 = arith.constant 3 : index
    %c2_123 = arith.constant 2 : index
    %152 = memref.load %arg0[%c3_122, %c2_123] : memref<8x4xi32, #tpu.memory_space<smem>>
    %c30_i32_124 = arith.constant 30 : i32
    %153 = arith.addi %152, %c30_i32_124 : i32
    %154 = arith.index_cast %153 : i32 to index
    %c0_125 = arith.constant 0 : index
    %155 = vector.load %arg1[%154, %c0_125] : memref<100x16xf32, #tpu.memory_space<vmem>>, vector<1x16xf32>
    %156 = vector.shape_cast %155 : vector<1x16xf32> to vector<16xf32>
    %c2_126 = arith.constant 2 : index
    %c3_127 = arith.constant 3 : index
    %c0_128 = arith.constant 0 : index
    %157 = vector.load %arg6[%c2_126, %c3_127, %c0_128] : memref<4x8x16xf32, #tpu.memory_space<vmem>>, vector<1x1x16xf32>
    %158 = vector.shape_cast %157 : vector<1x1x16xf32> to vector<16xf32>
    %159 = vector.shape_cast %156 : vector<16xf32> to vector<1x1x16xf32>
    tpu.vector_store %arg6[%c2_126, %c3_127, %c0_128], %159 {strides = array<i32>} : memref<4x8x16xf32, #tpu.memory_space<vmem>>, vector<1x1x16xf32>,
    %c4_129 = arith.constant 4 : index
    %c2_130 = arith.constant 2 : index
    %160 = memref.load %arg0[%c4_129, %c2_130] : memref<8x4xi32, #tpu.memory_space<smem>>
    %c30_i32_131 = arith.constant 30 : i32
    %161 = arith.addi %160, %c30_i32_131 : i32
    %162 = arith.index_cast %161 : i32 to index
    %c0_132 = arith.constant 0 : index
    %163 = vector.load %arg1[%162, %c0_132] : memref<100x16xf32, #tpu.memory_space<vmem>>, vector<1x16xf32>
    %164 = vector.shape_cast %163 : vector<1x16xf32> to vector<16xf32>
    %c2_133 = arith.constant 2 : index
    %c4_134 = arith.constant 4 : index
    %c0_135 = arith.constant 0 : index
    %165 = vector.load %arg6[%c2_133, %c4_134, %c0_135] : memref<4x8x16xf32, #tpu.memory_space<vmem>>, vector<1x1x16xf32>
    %166 = vector.shape_cast %165 : vector<1x1x16xf32> to vector<16xf32>
    %167 = vector.shape_cast %164 : vector<16xf32> to vector<1x1x16xf32>
    tpu.vector_store %arg6[%c2_133, %c4_134, %c0_135], %167 {strides = array<i32>} : memref<4x8x16xf32, #tpu.memory_space<vmem>>, vector<1x1x16xf32>,
    %c5_136 = arith.constant 5 : index
    %c2_137 = arith.constant 2 : index
    %168 = memref.load %arg0[%c5_136, %c2_137] : memref<8x4xi32, #tpu.memory_space<smem>>
    %c30_i32_138 = arith.constant 30 : i32
    %169 = arith.addi %168, %c30_i32_138 : i32
    %170 = arith.index_cast %169 : i32 to index
    %c0_139 = arith.constant 0 : index
    %171 = vector.load %arg1[%170, %c0_139] : memref<100x16xf32, #tpu.memory_space<vmem>>, vector<1x16xf32>
    %172 = vector.shape_cast %171 : vector<1x16xf32> to vector<16xf32>
    %c2_140 = arith.constant 2 : index
    %c5_141 = arith.constant 5 : index
    %c0_142 = arith.constant 0 : index
    %173 = vector.load %arg6[%c2_140, %c5_141, %c0_142] : memref<4x8x16xf32, #tpu.memory_space<vmem>>, vector<1x1x16xf32>
    %174 = vector.shape_cast %173 : vector<1x1x16xf32> to vector<16xf32>
    %175 = vector.shape_cast %172 : vector<16xf32> to vector<1x1x16xf32>
    tpu.vector_store %arg6[%c2_140, %c5_141, %c0_142], %175 {strides = array<i32>} : memref<4x8x16xf32, #tpu.memory_space<vmem>>, vector<1x1x16xf32>,
    %c6_143 = arith.constant 6 : index
    %c2_144 = arith.constant 2 : index
    %176 = memref.load %arg0[%c6_143, %c2_144] : memref<8x4xi32, #tpu.memory_space<smem>>
    %c30_i32_145 = arith.constant 30 : i32
    %177 = arith.addi %176, %c30_i32_145 : i32
    %178 = arith.index_cast %177 : i32 to index
    %c0_146 = arith.constant 0 : index
    %179 = vector.load %arg1[%178, %c0_146] : memref<100x16xf32, #tpu.memory_space<vmem>>, vector<1x16xf32>
    %180 = vector.shape_cast %179 : vector<1x16xf32> to vector<16xf32>
    %c2_147 = arith.constant 2 : index
    %c6_148 = arith.constant 6 : index
    %c0_149 = arith.constant 0 : index
    %181 = vector.load %arg6[%c2_147, %c6_148, %c0_149] : memref<4x8x16xf32, #tpu.memory_space<vmem>>, vector<1x1x16xf32>
    %182 = vector.shape_cast %181 : vector<1x1x16xf32> to vector<16xf32>
    %183 = vector.shape_cast %180 : vector<16xf32> to vector<1x1x16xf32>
    tpu.vector_store %arg6[%c2_147, %c6_148, %c0_149], %183 {strides = array<i32>} : memref<4x8x16xf32, #tpu.memory_space<vmem>>, vector<1x1x16xf32>,
    %c7_150 = arith.constant 7 : index
    %c2_151 = arith.constant 2 : index
    %184 = memref.load %arg0[%c7_150, %c2_151] : memref<8x4xi32, #tpu.memory_space<smem>>
    %c30_i32_152 = arith.constant 30 : i32
    %185 = arith.addi %184, %c30_i32_152 : i32
    %186 = arith.index_cast %185 : i32 to index
    %c0_153 = arith.constant 0 : index
    %187 = vector.load %arg1[%186, %c0_153] : memref<100x16xf32, #tpu.memory_space<vmem>>, vector<1x16xf32>
    %188 = vector.shape_cast %187 : vector<1x16xf32> to vector<16xf32>
    %c2_154 = arith.constant 2 : index
    %c7_155 = arith.constant 7 : index
    %c0_156 = arith.constant 0 : index
    %189 = vector.load %arg6[%c2_154, %c7_155, %c0_156] : memref<4x8x16xf32, #tpu.memory_space<vmem>>, vector<1x1x16xf32>
    %190 = vector.shape_cast %189 : vector<1x1x16xf32> to vector<16xf32>
    %191 = vector.shape_cast %188 : vector<16xf32> to vector<1x1x16xf32>
    tpu.vector_store %arg6[%c2_154, %c7_155, %c0_156], %191 {strides = array<i32>} : memref<4x8x16xf32, #tpu.memory_space<vmem>>, vector<1x1x16xf32>,
    %c0_157 = arith.constant 0 : index
    %c3_158 = arith.constant 3 : index
    %192 = memref.load %arg0[%c0_157, %c3_158] : memref<8x4xi32, #tpu.memory_space<smem>>
    %c60_i32 = arith.constant 60 : i32
    %193 = arith.addi %192, %c60_i32 : i32
    %194 = arith.index_cast %193 : i32 to index
    %c0_159 = arith.constant 0 : index
    %195 = vector.load %arg1[%194, %c0_159] : memref<100x16xf32, #tpu.memory_space<vmem>>, vector<1x16xf32>
    %196 = vector.shape_cast %195 : vector<1x16xf32> to vector<16xf32>
    %c3_160 = arith.constant 3 : index
    %c0_161 = arith.constant 0 : index
    %c0_162 = arith.constant 0 : index
    %197 = vector.load %arg6[%c3_160, %c0_161, %c0_162] : memref<4x8x16xf32, #tpu.memory_space<vmem>>, vector<1x1x16xf32>
    %198 = vector.shape_cast %197 : vector<1x1x16xf32> to vector<16xf32>
    %199 = vector.shape_cast %196 : vector<16xf32> to vector<1x1x16xf32>
    tpu.vector_store %arg6[%c3_160, %c0_161, %c0_162], %199 {strides = array<i32>} : memref<4x8x16xf32, #tpu.memory_space<vmem>>, vector<1x1x16xf32>,
    %c1_163 = arith.constant 1 : index
    %c3_164 = arith.constant 3 : index
    %200 = memref.load %arg0[%c1_163, %c3_164] : memref<8x4xi32, #tpu.memory_space<smem>>
    %c60_i32_165 = arith.constant 60 : i32
    %201 = arith.addi %200, %c60_i32_165 : i32
    %202 = arith.index_cast %201 : i32 to index
    %c0_166 = arith.constant 0 : index
    %203 = vector.load %arg1[%202, %c0_166] : memref<100x16xf32, #tpu.memory_space<vmem>>, vector<1x16xf32>
    %204 = vector.shape_cast %203 : vector<1x16xf32> to vector<16xf32>
    %c3_167 = arith.constant 3 : index
    %c1_168 = arith.constant 1 : index
    %c0_169 = arith.constant 0 : index
    %205 = vector.load %arg6[%c3_167, %c1_168, %c0_169] : memref<4x8x16xf32, #tpu.memory_space<vmem>>, vector<1x1x16xf32>
    %206 = vector.shape_cast %205 : vector<1x1x16xf32> to vector<16xf32>
    %207 = vector.shape_cast %204 : vector<16xf32> to vector<1x1x16xf32>
    tpu.vector_store %arg6[%c3_167, %c1_168, %c0_169], %207 {strides = array<i32>} : memref<4x8x16xf32, #tpu.memory_space<vmem>>, vector<1x1x16xf32>,
    %c2_170 = arith.constant 2 : index
    %c3_171 = arith.constant 3 : index
    %208 = memref.load %arg0[%c2_170, %c3_171] : memref<8x4xi32, #tpu.memory_space<smem>>
    %c60_i32_172 = arith.constant 60 : i32
    %209 = arith.addi %208, %c60_i32_172 : i32
    %210 = arith.index_cast %209 : i32 to index
    %c0_173 = arith.constant 0 : index
    %211 = vector.load %arg1[%210, %c0_173] : memref<100x16xf32, #tpu.memory_space<vmem>>, vector<1x16xf32>
    %212 = vector.shape_cast %211 : vector<1x16xf32> to vector<16xf32>
    %c3_174 = arith.constant 3 : index
    %c2_175 = arith.constant 2 : index
    %c0_176 = arith.constant 0 : index
    %213 = vector.load %arg6[%c3_174, %c2_175, %c0_176] : memref<4x8x16xf32, #tpu.memory_space<vmem>>, vector<1x1x16xf32>
    %214 = vector.shape_cast %213 : vector<1x1x16xf32> to vector<16xf32>
    %215 = vector.shape_cast %212 : vector<16xf32> to vector<1x1x16xf32>
    tpu.vector_store %arg6[%c3_174, %c2_175, %c0_176], %215 {strides = array<i32>} : memref<4x8x16xf32, #tpu.memory_space<vmem>>, vector<1x1x16xf32>,
    %c3_177 = arith.constant 3 : index
    %c3_178 = arith.constant 3 : index
    %216 = memref.load %arg0[%c3_177, %c3_178] : memref<8x4xi32, #tpu.memory_space<smem>>
    %c60_i32_179 = arith.constant 60 : i32
    %217 = arith.addi %216, %c60_i32_179 : i32
    %218 = arith.index_cast %217 : i32 to index
    %c0_180 = arith.constant 0 : index
    %219 = vector.load %arg1[%218, %c0_180] : memref<100x16xf32, #tpu.memory_space<vmem>>, vector<1x16xf32>
    %220 = vector.shape_cast %219 : vector<1x16xf32> to vector<16xf32>
    %c3_181 = arith.constant 3 : index
    %c3_182 = arith.constant 3 : index
    %c0_183 = arith.constant 0 : index
    %221 = vector.load %arg6[%c3_181, %c3_182, %c0_183] : memref<4x8x16xf32, #tpu.memory_space<vmem>>, vector<1x1x16xf32>
    %222 = vector.shape_cast %221 : vector<1x1x16xf32> to vector<16xf32>
    %223 = vector.shape_cast %220 : vector<16xf32> to vector<1x1x16xf32>
    tpu.vector_store %arg6[%c3_181, %c3_182, %c0_183], %223 {strides = array<i32>} : memref<4x8x16xf32, #tpu.memory_space<vmem>>, vector<1x1x16xf32>,
    %c4_184 = arith.constant 4 : index
    %c3_185 = arith.constant 3 : index
    %224 = memref.load %arg0[%c4_184, %c3_185] : memref<8x4xi32, #tpu.memory_space<smem>>
    %c60_i32_186 = arith.constant 60 : i32
    %225 = arith.addi %224, %c60_i32_186 : i32
    %226 = arith.index_cast %225 : i32 to index
    %c0_187 = arith.constant 0 : index
    %227 = vector.load %arg1[%226, %c0_187] : memref<100x16xf32, #tpu.memory_space<vmem>>, vector<1x16xf32>
    %228 = vector.shape_cast %227 : vector<1x16xf32> to vector<16xf32>
    %c3_188 = arith.constant 3 : index
    %c4_189 = arith.constant 4 : index
    %c0_190 = arith.constant 0 : index
    %229 = vector.load %arg6[%c3_188, %c4_189, %c0_190] : memref<4x8x16xf32, #tpu.memory_space<vmem>>, vector<1x1x16xf32>
    %230 = vector.shape_cast %229 : vector<1x1x16xf32> to vector<16xf32>
    %231 = vector.shape_cast %228 : vector<16xf32> to vector<1x1x16xf32>
    tpu.vector_store %arg6[%c3_188, %c4_189, %c0_190], %231 {strides = array<i32>} : memref<4x8x16xf32, #tpu.memory_space<vmem>>, vector<1x1x16xf32>,
    %c5_191 = arith.constant 5 : index
    %c3_192 = arith.constant 3 : index
    %232 = memref.load %arg0[%c5_191, %c3_192] : memref<8x4xi32, #tpu.memory_space<smem>>
    %c60_i32_193 = arith.constant 60 : i32
    %233 = arith.addi %232, %c60_i32_193 : i32
    %234 = arith.index_cast %233 : i32 to index
    %c0_194 = arith.constant 0 : index
    %235 = vector.load %arg1[%234, %c0_194] : memref<100x16xf32, #tpu.memory_space<vmem>>, vector<1x16xf32>
    %236 = vector.shape_cast %235 : vector<1x16xf32> to vector<16xf32>
    %c3_195 = arith.constant 3 : index
    %c5_196 = arith.constant 5 : index
    %c0_197 = arith.constant 0 : index
    %237 = vector.load %arg6[%c3_195, %c5_196, %c0_197] : memref<4x8x16xf32, #tpu.memory_space<vmem>>, vector<1x1x16xf32>
    %238 = vector.shape_cast %237 : vector<1x1x16xf32> to vector<16xf32>
    %239 = vector.shape_cast %236 : vector<16xf32> to vector<1x1x16xf32>
    tpu.vector_store %arg6[%c3_195, %c5_196, %c0_197], %239 {strides = array<i32>} : memref<4x8x16xf32, #tpu.memory_space<vmem>>, vector<1x1x16xf32>,
    %c6_198 = arith.constant 6 : index
    %c3_199 = arith.constant 3 : index
    %240 = memref.load %arg0[%c6_198, %c3_199] : memref<8x4xi32, #tpu.memory_space<smem>>
    %c60_i32_200 = arith.constant 60 : i32
    %241 = arith.addi %240, %c60_i32_200 : i32
    %242 = arith.index_cast %241 : i32 to index
    %c0_201 = arith.constant 0 : index
    %243 = vector.load %arg1[%242, %c0_201] : memref<100x16xf32, #tpu.memory_space<vmem>>, vector<1x16xf32>
    %244 = vector.shape_cast %243 : vector<1x16xf32> to vector<16xf32>
    %c3_202 = arith.constant 3 : index
    %c6_203 = arith.constant 6 : index
    %c0_204 = arith.constant 0 : index
    %245 = vector.load %arg6[%c3_202, %c6_203, %c0_204] : memref<4x8x16xf32, #tpu.memory_space<vmem>>, vector<1x1x16xf32>
    %246 = vector.shape_cast %245 : vector<1x1x16xf32> to vector<16xf32>
    %247 = vector.shape_cast %244 : vector<16xf32> to vector<1x1x16xf32>
    tpu.vector_store %arg6[%c3_202, %c6_203, %c0_204], %247 {strides = array<i32>} : memref<4x8x16xf32, #tpu.memory_space<vmem>>, vector<1x1x16xf32>,
    %c7_205 = arith.constant 7 : index
    %c3_206 = arith.constant 3 : index
    %248 = memref.load %arg0[%c7_205, %c3_206] : memref<8x4xi32, #tpu.memory_space<smem>>
    %c60_i32_207 = arith.constant 60 : i32
    %249 = arith.addi %248, %c60_i32_207 : i32
    %250 = arith.index_cast %249 : i32 to index
    %c0_208 = arith.constant 0 : index
    %251 = vector.load %arg1[%250, %c0_208] : memref<100x16xf32, #tpu.memory_space<vmem>>, vector<1x16xf32>
    %252 = vector.shape_cast %251 : vector<1x16xf32> to vector<16xf32>
    %c3_209 = arith.constant 3 : index
    %c7_210 = arith.constant 7 : index
    %c0_211 = arith.constant 0 : index
    %253 = vector.load %arg6[%c3_209, %c7_210, %c0_211] : memref<4x8x16xf32, #tpu.memory_space<vmem>>, vector<1x1x16xf32>
    %254 = vector.shape_cast %253 : vector<1x1x16xf32> to vector<16xf32>
    %255 = vector.shape_cast %252 : vector<16xf32> to vector<1x1x16xf32>
    tpu.vector_store %arg6[%c3_209, %c7_210, %c0_211], %255 {strides = array<i32>} : memref<4x8x16xf32, #tpu.memory_space<vmem>>, vector<1x1x16xf32>,
    %cst = arith.constant 0.000000e+00 : f32
    %256 = vector.broadcast %cst : f32 to vector<8x32xf32>
    %c0_212 = arith.constant 0 : index
    %c0_213 = arith.constant 0 : index
    %c0_214 = arith.constant 0 : index
    %257 = vector.load %arg6[%c0_212, %c0_213, %c0_214] : memref<4x8x16xf32, #tpu.memory_space<vmem>>, vector<1x8x16xf32>
    %258 = vector.shape_cast %257 : vector<1x8x16xf32> to vector<8x16xf32>
    %259 = arith.truncf %258 : vector<8x16xf32> to vector<8x16xbf16>
    %c0_215 = arith.constant 0 : index
    %c0_216 = arith.constant 0 : index
    %c0_217 = arith.constant 0 : index
    %260 = vector.load %arg2[%c0_215, %c0_216, %c0_217] : memref<4x16x32xbf16, #tpu.memory_space<vmem>>, vector<1x16x32xbf16>
    %261 = vector.shape_cast %260 : vector<1x16x32xbf16> to vector<16x32xbf16>
    %cst_218 = arith.constant dense<0.000000e+00> : vector<8x32xf32>
    %262 = tpu.matmul %259, %261, %cst_218 {dimension_numbers = #tpu.dot_dimension_numbers<[1], [0], [0], [1], [0, 0, 1, 1], [], []>} : vector<8x16xbf16>, vector<16x32xbf16>, vector<8x32xf32> -> vector<8x32xf32>
    %263 = arith.addf %256, %262 : vector<8x32xf32>
    %c1_219 = arith.constant 1 : index
    %c0_220 = arith.constant 0 : index
    %c0_221 = arith.constant 0 : index
    %264 = vector.load %arg6[%c1_219, %c0_220, %c0_221] : memref<4x8x16xf32, #tpu.memory_space<vmem>>, vector<1x8x16xf32>
    %265 = vector.shape_cast %264 : vector<1x8x16xf32> to vector<8x16xf32>
    %266 = arith.truncf %265 : vector<8x16xf32> to vector<8x16xbf16>
    %c1_222 = arith.constant 1 : index
    %c0_223 = arith.constant 0 : index
    %c0_224 = arith.constant 0 : index
    %267 = vector.load %arg2[%c1_222, %c0_223, %c0_224] : memref<4x16x32xbf16, #tpu.memory_space<vmem>>, vector<1x16x32xbf16>
    %268 = vector.shape_cast %267 : vector<1x16x32xbf16> to vector<16x32xbf16>
    %cst_225 = arith.constant dense<0.000000e+00> : vector<8x32xf32>
    %269 = tpu.matmul %266, %268, %cst_225 {dimension_numbers = #tpu.dot_dimension_numbers<[1], [0], [0], [1], [0, 0, 1, 1], [], []>} : vector<8x16xbf16>, vector<16x32xbf16>, vector<8x32xf32> -> vector<8x32xf32>
    %270 = arith.addf %263, %269 : vector<8x32xf32>
    %c2_226 = arith.constant 2 : index
    %c0_227 = arith.constant 0 : index
    %c0_228 = arith.constant 0 : index
    %271 = vector.load %arg6[%c2_226, %c0_227, %c0_228] : memref<4x8x16xf32, #tpu.memory_space<vmem>>, vector<1x8x16xf32>
    %272 = vector.shape_cast %271 : vector<1x8x16xf32> to vector<8x16xf32>
    %273 = arith.truncf %272 : vector<8x16xf32> to vector<8x16xbf16>
    %c2_229 = arith.constant 2 : index
    %c0_230 = arith.constant 0 : index
    %c0_231 = arith.constant 0 : index
    %274 = vector.load %arg2[%c2_229, %c0_230, %c0_231] : memref<4x16x32xbf16, #tpu.memory_space<vmem>>, vector<1x16x32xbf16>
    %275 = vector.shape_cast %274 : vector<1x16x32xbf16> to vector<16x32xbf16>
    %cst_232 = arith.constant dense<0.000000e+00> : vector<8x32xf32>
    %276 = tpu.matmul %273, %275, %cst_232 {dimension_numbers = #tpu.dot_dimension_numbers<[1], [0], [0], [1], [0, 0, 1, 1], [], []>} : vector<8x16xbf16>, vector<16x32xbf16>, vector<8x32xf32> -> vector<8x32xf32>
    %277 = arith.addf %270, %276 : vector<8x32xf32>
    %c3_233 = arith.constant 3 : index
    %c0_234 = arith.constant 0 : index
    %c0_235 = arith.constant 0 : index
    %278 = vector.load %arg6[%c3_233, %c0_234, %c0_235] : memref<4x8x16xf32, #tpu.memory_space<vmem>>, vector<1x8x16xf32>
    %279 = vector.shape_cast %278 : vector<1x8x16xf32> to vector<8x16xf32>
    %280 = arith.truncf %279 : vector<8x16xf32> to vector<8x16xbf16>
    %c3_236 = arith.constant 3 : index
    %c0_237 = arith.constant 0 : index
    %c0_238 = arith.constant 0 : index
    %281 = vector.load %arg2[%c3_236, %c0_237, %c0_238] : memref<4x16x32xbf16, #tpu.memory_space<vmem>>, vector<1x16x32xbf16>
    %282 = vector.shape_cast %281 : vector<1x16x32xbf16> to vector<16x32xbf16>
    %cst_239 = arith.constant dense<0.000000e+00> : vector<8x32xf32>
    %283 = tpu.matmul %280, %282, %cst_239 {dimension_numbers = #tpu.dot_dimension_numbers<[1], [0], [0], [1], [0, 0, 1, 1], [], []>} : vector<8x16xbf16>, vector<16x32xbf16>, vector<8x32xf32> -> vector<8x32xf32>
    %284 = arith.addf %277, %283 : vector<8x32xf32>
    %c0_240 = arith.constant 0 : index
    %c0_241 = arith.constant 0 : index
    %285 = vector.load %arg4[%c0_240, %c0_241] : memref<1x128xf32, #tpu.memory_space<vmem>>, vector<1x32xf32>
    %286 = vector.broadcast %285 : vector<1x32xf32> to vector<8x32xf32>
    %287 = arith.addf %284, %286 : vector<8x32xf32>
    %cst_242 = arith.constant 0.000000e+00 : f32
    %288 = vector.broadcast %cst_242 : f32 to vector<8x32xf32>
    %289 = arith.maximumf %287, %288 : vector<8x32xf32>
    %290 = arith.truncf %289 : vector<8x32xf32> to vector<8x32xbf16>
    %c0_243 = arith.constant 0 : index
    %c0_244 = arith.constant 0 : index
    %291 = vector.load %arg3[%c0_243, %c0_244] : memref<32x16xbf16, #tpu.memory_space<vmem>>, vector<32x16xbf16>
    %cst_245 = arith.constant dense<0.000000e+00> : vector<8x16xf32>
    %292 = tpu.matmul %290, %291, %cst_245 {dimension_numbers = #tpu.dot_dimension_numbers<[1], [0], [0], [1], [0, 0, 1, 1], [], []>} : vector<8x32xbf16>, vector<32x16xbf16>, vector<8x16xf32> -> vector<8x16xf32>
    %c0_246 = arith.constant 0 : index
    %c32 = arith.constant 32 : index
    %293 = vector.load %arg4[%c0_246, %c32] : memref<1x128xf32, #tpu.memory_space<vmem>>, vector<1x16xf32>
    %294 = vector.broadcast %293 : vector<1x16xf32> to vector<8x16xf32>
    %295 = arith.addf %292, %294 : vector<8x16xf32>
    %cst_247 = arith.constant 0.000000e+00 : f32
    %296 = vector.broadcast %cst_247 : f32 to vector<8x16xf32>
    %297 = arith.maximumf %295, %296 : vector<8x16xf32>
    %c0_248 = arith.constant 0 : index
    %c48 = arith.constant 48 : index
    %298 = vector.load %arg4[%c0_248, %c48] : memref<1x128xf32, #tpu.memory_space<vmem>>, vector<1x16xf32>
    %c0_249 = arith.constant 0 : index
    %c64 = arith.constant 64 : index
    %299 = vector.load %arg4[%c0_249, %c64] : memref<1x128xf32, #tpu.memory_space<vmem>>, vector<1x1xf32>
    %300 = vector.broadcast %298 : vector<1x16xf32> to vector<8x16xf32>
    %301 = arith.mulf %297, %300 : vector<8x16xf32>
    %cst_250 = arith.constant dense<0.000000e+00> : vector<8xf32>
    %302 = vector.multi_reduction <add>, %301, %cst_250 [1] : vector<8x16xf32> to vector<8xf32>
    %303 = vector.shape_cast %302 : vector<8xf32> to vector<8x1xf32>
    %304 = vector.broadcast %299 : vector<1x1xf32> to vector<8x1xf32>
    %305 = arith.addf %303, %304 : vector<8x1xf32>
    %306 = arith.negf %305 : vector<8x1xf32>
    %307 = math.exp %306 : vector<8x1xf32>
    %cst_251 = arith.constant 1.000000e+00 : f32
    %308 = vector.broadcast %cst_251 : f32 to vector<8x1xf32>
    %309 = arith.addf %308, %307 : vector<8x1xf32>
    %310 = arith.divf %308, %309 : vector<8x1xf32>
    %c0_252 = arith.constant 0 : index
    %c0_253 = arith.constant 0 : index
    %311 = vector.load %arg5[%c0_252, %c0_253] : memref<8x1xf32, #tpu.memory_space<vmem>>, vector<8x1xf32>
    tpu.vector_store %arg5[%c0_252, %c0_253], %310 {strides = array<i32>} : memref<8x1xf32, #tpu.memory_space<vmem>>, vector<8x1xf32>,
    return
  }
}

</mosaic_0001>

<llo_original>
// kernel: forward.1
$region0: #{forward.1}
  #allocation0 [shape = 'u32[]', space=smem, size = 0x4, offset = 0x4, fixed_abs, tag = 'smem constant byte address 0x4 - core index']
  #allocation1 [shape = 'u32[72,128]{1,0:T(1,128)}', space=vmem, size = 0x9000, scoped, tag = 'internal scratch']
  #allocation2 [shape = 'f32[4,8,16]{2,1,0:T(8,128)}', space=vmem, size = 0x4000, scoped, tag = 'scratch operand']
  %s0 = inlined_call_operand.vmem [shape: s32[8,4], index: 0, kind: input, shape index: {}]
  %s1 = inlined_call_operand.vmem [shape: f32[100,16], index: 1, kind: input, shape index: {}]
  %s2 = inlined_call_operand.vmem [shape: bf16[4,16,32], index: 2, kind: input, shape index: {}]
  %s3 = inlined_call_operand.vmem [shape: bf16[32,16], index: 3, kind: input, shape index: {}]
  %s4 = inlined_call_operand.vmem [shape: f32[1,128], index: 4, kind: input, shape index: {}]
  %s5 = inlined_call_operand.vmem [shape: f32[8,1], index: 5, kind: output, shape index: {}]
  %s6 = sld [smem:[#allocation0]]
  $region34: #{forward.1} parent=0
    _
  %s8 = ssub.s32 1, %s6
  %s9 = scalar_select 0, %s8, %s6
  $region1: #{forward.1} parent=0
    #allocation3 [shape = 'u8[4096]{0}', space=smem, size = 0x1000, scoped, tag = 'input window, operand 0, single buffered']
    #allocation4 [shape = 's32[1]{0}', space=sflag, size = 0x4, scoped, tag = 'scoped memory for forward.1']
    %10 = vsyncpa [#allocation4], 0
    // Predicated region
    $region2: #{forward.1} parent=1 // pred_check
      _
    $region3: #{forward.1} parent=1 // pred_check_branch
      %12 = sbr.rel (0) target = $region5
    $region4: #{forward.1} parent=1 // pred_region
      %14 = vsyncadd [#allocation4], 0
      %s16 = sshll.u32 %s0, 4
      %s17 = int_to_ptr.vmem [resolvable:$true] %s16
      %19 = dma.vmem_to_smem %s17, 128, [#allocation3], [#allocation4]
    $region5: #{forward.1} parent=1 // pred_fallthru
      _
    // Predicated region
    $region6: #{forward.1} parent=1 // pred_check
      _
    $region7: #{forward.1} parent=1 // pred_check_branch
      %21 = sbr.rel (0) target = $region9
    $region8: #{forward.1} parent=1 // pred_region
      _
    $region9: #{forward.1} parent=1 // pred_fallthru
      _
    // Predicated region
    $region10: #{forward.1} parent=1 // pred_check
      _
    $region11: #{forward.1} parent=1 // pred_check_branch
      %23 = sbr.rel (0) target = $region13
    $region12: #{forward.1} parent=1 // pred_region
      _
    $region13: #{forward.1} parent=1 // pred_fallthru
      _
    // Predicated region
    $region14: #{forward.1} parent=1 // pred_check
      _
    $region15: #{forward.1} parent=1 // pred_check_branch
      %25 = sbr.rel (0) target = $region17
    $region16: #{forward.1} parent=1 // pred_region
      _
    $region17: #{forward.1} parent=1 // pred_fallthru
      _
    // Predicated region
    $region18: #{forward.1} parent=1 // pred_check
      _
    $region19: #{forward.1} parent=1 // pred_check_branch
      %27 = sbr.rel (0) target = $region21
    $region20: #{forward.1} parent=1 // pred_region
      _
    $region21: #{forward.1} parent=1 // pred_fallthru
      _
    // Predicated region
    $region22: #{forward.1} parent=1 // pred_check
      _
    $region23: #{forward.1} parent=1 // pred_check_branch
      %29 = sbr.rel (0) target = $region25
    $region24: #{forward.1} parent=1 // pred_region
      %31 = dma.done [#allocation4], 128
    $region25: #{forward.1} parent=1 // pred_fallthru
      _
    %32 = sfence
    %s34 = sld [smem:[#allocation3]]
    %s35 = scalar_lea.vmem %s1, %s34
    %v36 = vld [vmem:[%s35] sm:$0x1]
    %vm37 = vcmask 122880
    %38 = vst.msk [vmem:[#allocation2] sm:$0x1] %vm37, %v36
    %s39 = sld [smem:[#allocation3 + $0x80]]
    %s40 = scalar_lea.vmem %s1, %s39
    %v41 = vld [vmem:[%s40] sm:$0x1]
    %42 = vst.msk [vmem:[#allocation2 + $0x1] sm:$0x1] %vm37, %v41
    %s43 = sld [smem:[#allocation3 + $0x100]]
    %s44 = scalar_lea.vmem %s1, %s43
    %v45 = vld [vmem:[%s44] sm:$0x1]
    %46 = vst.msk [vmem:[#allocation2 + $0x2] sm:$0x1] %vm37, %v45
    %s47 = sld [smem:[#allocation3 + $0x180]]
    %s48 = scalar_lea.vmem %s1, %s47
    %v49 = vld [vmem:[%s48] sm:$0x1]
    %50 = vst.msk [vmem:[#allocation2 + $0x3] sm:$0x1] %vm37, %v49
    %s51 = sld [smem:[#allocation3 + $0x200]]
    %s52 = scalar_lea.vmem %s1, %s51
    %v53 = vld [vmem:[%s52] sm:$0x1]
    %54 = vst.msk [vmem:[#allocation2 + $0x4] sm:$0x1] %vm37, %v53
    %s55 = sld [smem:[#allocation3 + $0x280]]
    %s56 = scalar_lea.vmem %s1, %s55
    %v57 = vld [vmem:[%s56] sm:$0x1]
    %58 = vst.msk [vmem:[#allocation2 + $0x5] sm:$0x1] %vm37, %v57
    %s59 = sld [smem:[#allocation3 + $0x300]]
    %s60 = scalar_lea.vmem %s1, %s59
    %v61 = vld [vmem:[%s60] sm:$0x1]
    %62 = vst.msk [vmem:[#allocation2 + $0x6] sm:$0x1] %vm37, %v61
    %s63 = sld [smem:[#allocation3 + $0x380]]
    %s64 = scalar_lea.vmem %s1, %s63
    %v65 = vld [vmem:[%s64] sm:$0x1]
    %66 = vst.msk [vmem:[#allocation2 + $0x7] sm:$0x1] %vm37, %v65
    %s67 = sld [smem:[#allocation3 + $0x1]]
    %s68 = sadd.s32 %s67, 10
    %s69 = scalar_lea.vmem %s1, %s68
    %v70 = vld [vmem:[%s69] sm:$0x1]
    %s71 = scalar_lea.vmem [#allocation2], 8
    %72 = vst.msk [vmem:[%s71] sm:$0x1] %vm37, %v70
    %s73 = sld [smem:[#allocation3 + $0x81]]
    %s74 = sadd.s32 %s73, 10
    %s75 = scalar_lea.vmem %s1, %s74
    %v76 = vld [vmem:[%s75] sm:$0x1]
    %77 = vst.msk [vmem:[%s71 + $0x1] sm:$0x1] %vm37, %v76
    %s78 = sld [smem:[#allocation3 + $0x101]]
    %s79 = sadd.s32 %s78, 10
    %s80 = scalar_lea.vmem %s1, %s79
    %v81 = vld [vmem:[%s80] sm:$0x1]
    %82 = vst.msk [vmem:[%s71 + $0x2] sm:$0x1] %vm37, %v81
    %s83 = sld [smem:[#allocation3 + $0x181]]
    %s84 = sadd.s32 %s83, 10
    %s85 = scalar_lea.vmem %s1, %s84
    %v86 = vld [vmem:[%s85] sm:$0x1]
    %87 = vst.msk [vmem:[%s71 + $0x3] sm:$0x1] %vm37, %v86
    %s88 = sld [smem:[#allocation3 + $0x201]]
    %s89 = sadd.s32 %s88, 10
    %s90 = scalar_lea.vmem %s1, %s89
    %v91 = vld [vmem:[%s90] sm:$0x1]
    %92 = vst.msk [vmem:[%s71 + $0x4] sm:$0x1] %vm37, %v91
    %s93 = sld [smem:[#allocation3 + $0x281]]
    %s94 = sadd.s32 %s93, 10
    %s95 = scalar_lea.vmem %s1, %s94
    %v96 = vld [vmem:[%s95] sm:$0x1]
    %97 = vst.msk [vmem:[%s71 + $0x5] sm:$0x1] %vm37, %v96
    %s98 = sld [smem:[#allocation3 + $0x301]]
    %s99 = sadd.s32 %s98, 10
    %s100 = scalar_lea.vmem %s1, %s99
    %v101 = vld [vmem:[%s100] sm:$0x1]
    %102 = vst.msk [vmem:[%s71 + $0x6] sm:$0x1] %vm37, %v101
    %s103 = sld [smem:[#allocation3 + $0x381]]
    %s104 = sadd.s32 %s103, 10
    %s105 = scalar_lea.vmem %s1, %s104
    %v106 = vld [vmem:[%s105] sm:$0x1]
    %107 = vst.msk [vmem:[%s71 + $0x7] sm:$0x1] %vm37, %v106
    %s108 = sld [smem:[#allocation3 + $0x2]]
    %s109 = sadd.s32 %s108, 30
    %s110 = scalar_lea.vmem %s1, %s109
    %v111 = vld [vmem:[%s110] sm:$0x1]
    %s112 = scalar_lea.vmem [#allocation2], 16
    %113 = vst.msk [vmem:[%s112] sm:$0x1] %vm37, %v111
    %s114 = sld [smem:[#allocation3 + $0x82]]
    %s115 = sadd.s32 %s114, 30
    %s116 = scalar_lea.vmem %s1, %s115
    %v117 = vld [vmem:[%s116] sm:$0x1]
    %118 = vst.msk [vmem:[%s112 + $0x1] sm:$0x1] %vm37, %v117
    %s119 = sld [smem:[#allocation3 + $0x102]]
    %s120 = sadd.s32 %s119, 30
    %s121 = scalar_lea.vmem %s1, %s120
    %v122 = vld [vmem:[%s121] sm:$0x1]
    %123 = vst.msk [vmem:[%s112 + $0x2] sm:$0x1] %vm37, %v122
    %s124 = sld [smem:[#allocation3 + $0x182]]
    %s125 = sadd.s32 %s124, 30
    %s126 = scalar_lea.vmem %s1, %s125
    %v127 = vld [vmem:[%s126] sm:$0x1]
    %128 = vst.msk [vmem:[%s112 + $0x3] sm:$0x1] %vm37, %v127
    %s129 = sld [smem:[#allocation3 + $0x202]]
    %s130 = sadd.s32 %s129, 30
    %s131 = scalar_lea.vmem %s1, %s130
    %v132 = vld [vmem:[%s131] sm:$0x1]
    %133 = vst.msk [vmem:[%s112 + $0x4] sm:$0x1] %vm37, %v132
    %s134 = sld [smem:[#allocation3 + $0x282]]
    %s135 = sadd.s32 %s134, 30
    %s136 = scalar_lea.vmem %s1, %s135
    %v137 = vld [vmem:[%s136] sm:$0x1]
    %138 = vst.msk [vmem:[%s112 + $0x5] sm:$0x1] %vm37, %v137
    %s139 = sld [smem:[#allocation3 + $0x302]]
    %s140 = sadd.s32 %s139, 30
    %s141 = scalar_lea.vmem %s1, %s140
    %v142 = vld [vmem:[%s141] sm:$0x1]
    %143 = vst.msk [vmem:[%s112 + $0x6] sm:$0x1] %vm37, %v142
    %s144 = sld [smem:[#allocation3 + $0x382]]
    %s145 = sadd.s32 %s144, 30
    %s146 = scalar_lea.vmem %s1, %s145
    %v147 = vld [vmem:[%s146] sm:$0x1]
    %148 = vst.msk [vmem:[%s112 + $0x7] sm:$0x1] %vm37, %v147
    %s149 = sld [smem:[#allocation3 + $0x3]]
    %s150 = sadd.s32 %s149, 60
    %s151 = scalar_lea.vmem %s1, %s150
    %v152 = vld [vmem:[%s151] sm:$0x1]
    %s153 = scalar_lea.vmem [#allocation2], 24
    %154 = vst.msk [vmem:[%s153] sm:$0x1] %vm37, %v152
    %s155 = sld [smem:[#allocation3 + $0x83]]
    %s156 = sadd.s32 %s155, 60
    %s157 = scalar_lea.vmem %s1, %s156
    %v158 = vld [vmem:[%s157] sm:$0x1]
    %159 = vst.msk [vmem:[%s153 + $0x1] sm:$0x1] %vm37, %v158
    %s160 = sld [smem:[#allocation3 + $0x103]]
    %s161 = sadd.s32 %s160, 60
    %s162 = scalar_lea.vmem %s1, %s161
    %v163 = vld [vmem:[%s162] sm:$0x1]
    %164 = vst.msk [vmem:[%s153 + $0x2] sm:$0x1] %vm37, %v163
    %s165 = sld [smem:[#allocation3 + $0x183]]
    %s166 = sadd.s32 %s165, 60
    %s167 = scalar_lea.vmem %s1, %s166
    %v168 = vld [vmem:[%s167] sm:$0x1]
    %169 = vst.msk [vmem:[%s153 + $0x3] sm:$0x1] %vm37, %v168
    %s170 = sld [smem:[#allocation3 + $0x203]]
    %s171 = sadd.s32 %s170, 60
    %s172 = scalar_lea.vmem %s1, %s171
    %v173 = vld [vmem:[%s172] sm:$0x1]
    %174 = vst.msk [vmem:[%s153 + $0x4] sm:$0x1] %vm37, %v173
    %s175 = sld [smem:[#allocation3 + $0x283]]
    %s176 = sadd.s32 %s175, 60
    %s177 = scalar_lea.vmem %s1, %s176
    %v178 = vld [vmem:[%s177] sm:$0x1]
    %179 = vst.msk [vmem:[%s153 + $0x5] sm:$0x1] %vm37, %v178
    %s180 = sld [smem:[#allocation3 + $0x303]]
    %s181 = sadd.s32 %s180, 60
    %s182 = scalar_lea.vmem %s1, %s181
    %v183 = vld [vmem:[%s182] sm:$0x1]
    %184 = vst.msk [vmem:[%s153 + $0x6] sm:$0x1] %vm37, %v183
    %s185 = sld [smem:[#allocation3 + $0x383]]
    %s186 = sadd.s32 %s185, 60
    %s187 = scalar_lea.vmem %s1, %s186
    %v188 = vld [vmem:[%s187] sm:$0x1]
    %189 = vst.msk [vmem:[%s153 + $0x7] sm:$0x1] %vm37, %v188
    %v190 = vld [vmem:[#allocation2] sm:$0xff]
    %v191 = vpack.c.bf16 %v190, %v190
    %v192 = vld [vmem:[%s2] sm:$0xf]
    %v193 = vld [vmem:[%s2 + $0x4] sm:$0xf]
    %v194 = vld [vmem:[%s71] sm:$0xff]
    %v195 = vpack.c.bf16 %v194, %v194
    %s196 = scalar_lea.vmem %s2, 8
    %v197 = vld [vmem:[%s196] sm:$0xf]
    %v198 = vld [vmem:[%s196 + $0x4] sm:$0xf]
    %v201 = vunpack.c.l.b16 %v197
    %v202 = vunpack.c.l.b16 %v198
    %v203 = vpack.c.b16 %v202, %v201
    %vm205 = vcmask 130048
    %v207 = vsel %vm205, %v195, 0
    %209 = vmatpush.bf16.msra.mxu0 0
    %210 = vmatpush.bf16.msra.mxu0 0
    %211 = vmatpush.bf16.msra.mxu0 0
    %212 = vmatpush.bf16.msra.mxu0 0
    %213 = vmatpush.bf16.msra.mxu0 0
    %214 = vmatpush.bf16.msra.mxu0 0
    %215 = vmatpush.bf16.msra.mxu0 0
    %216 = vmatpush.bf16.msra.mxu0 %v203
    %217 = vmatmul.bf16.gmra.mxu0 %v207
    %v218 = vpop.f32.mrf.mxu0
    %v219 = vadd.f32 0.0, %v218
    %v220 = vpop.f32.mrf.mxu0
    %221 = vdwg.mxu0
    %v224 = vunpack.c.l.b16 %v192
    %v225 = vunpack.c.l.b16 %v193
    %v226 = vpack.c.b16 %v225, %v224
    %v229 = vsel %vm205, %v191, 0
    %231 = vmatpush.bf16.msra.mxu0 0
    %232 = vmatpush.bf16.msra.mxu0 0
    %233 = vmatpush.bf16.msra.mxu0 0
    %234 = vmatpush.bf16.msra.mxu0 0
    %235 = vmatpush.bf16.msra.mxu0 0
    %236 = vmatpush.bf16.msra.mxu0 0
    %237 = vmatpush.bf16.msra.mxu0 0
    %238 = vmatpush.bf16.msra.mxu0 %v226
    %239 = vmatmul.bf16.gmra.mxu0 %v229
    %v240 = vpop.f32.mrf.mxu0
    %v241 = vadd.f32 %v219, %v240
    %v242 = vpop.f32.mrf.mxu0
    %243 = vdwg.mxu0
    %v244 = vld [vmem:[%s112] sm:$0xff]
    %v245 = vpack.c.bf16 %v244, %v244
    %s246 = scalar_lea.vmem %s2, 16
    %v247 = vld [vmem:[%s246] sm:$0xf]
    %v248 = vld [vmem:[%s246 + $0x4] sm:$0xf]
    %v251 = vunpack.c.l.b16 %v247
    %v252 = vunpack.c.l.b16 %v248
    %v253 = vpack.c.b16 %v252, %v251
    %v256 = vsel %vm205, %v245, 0
    %258 = vmatpush.bf16.msra.mxu0 0
    %259 = vmatpush.bf16.msra.mxu0 0
    %260 = vmatpush.bf16.msra.mxu0 0
    %261 = vmatpush.bf16.msra.mxu0 0
    %262 = vmatpush.bf16.msra.mxu0 0
    %263 = vmatpush.bf16.msra.mxu0 0
    %264 = vmatpush.bf16.msra.mxu0 0
    %265 = vmatpush.bf16.msra.mxu0 %v253
    %266 = vmatmul.bf16.gmra.mxu0 %v256
    %v267 = vpop.f32.mrf.mxu0
    %v268 = vadd.f32 0.0, %v267
    %v269 = vpop.f32.mrf.mxu0
    %270 = vdwg.mxu0
    %v271 = vadd.f32 %v241, %v268
    %v272 = vld [vmem:[%s153] sm:$0xff]
    %v273 = vpack.c.bf16 %v272, %v272
    %s274 = scalar_lea.vmem %s2, 24
    %v275 = vld [vmem:[%s274] sm:$0xf]
    %v276 = vld [vmem:[%s274 + $0x4] sm:$0xf]
    %v279 = vunpack.c.l.b16 %v275
    %v280 = vunpack.c.l.b16 %v276
    %v281 = vpack.c.b16 %v280, %v279
    %v284 = vsel %vm205, %v273, 0
    %286 = vmatpush.bf16.msra.mxu0 0
    %287 = vmatpush.bf16.msra.mxu0 0
    %288 = vmatpush.bf16.msra.mxu0 0
    %289 = vmatpush.bf16.msra.mxu0 0
    %290 = vmatpush.bf16.msra.mxu0 0
    %291 = vmatpush.bf16.msra.mxu0 0
    %292 = vmatpush.bf16.msra.mxu0 0
    %293 = vmatpush.bf16.msra.mxu0 %v281
    %294 = vmatmul.bf16.gmra.mxu0 %v284
    %v295 = vpop.f32.mrf.mxu0
    %v296 = vadd.f32 0.0, %v295
    %v297 = vpop.f32.mrf.mxu0
    %298 = vdwg.mxu0
    %v299 = vadd.f32 %v271, %v296
    %v300 = vld [vmem:[%s4] sm:$0x1]
    %v302 = vperm.slane %v300, 0
    %v304 = vadd.f32 %v299, %v302
    %v305 = vmax.f32 %v304, 0.0
    %v306 = vpack.c.bf16 %v305, %v305
    %v307 = vld [vmem:[%s3] sm:$0xf]
    %v308 = vld [vmem:[%s3 + $0x4] sm:$0xf]
    %v309 = vld [vmem:[%s3 + $0x8] sm:$0xf]
    %v310 = vld [vmem:[%s3 + $0xc] sm:$0xf]
    %v315 = vunpack.c.l.b16 %v307
    %v316 = vunpack.c.l.b16 %v308
    %v317 = vunpack.c.l.b16 %v309
    %v318 = vunpack.c.l.b16 %v310
    %v319 = vpack.c.b16 %v316, %v315
    %v320 = vpack.c.b16 %v318, %v317
    %323 = vrot.lane.b32.xlu0 %v302, 96
    %v324 = vpop.permute.xlu0 %323
    %vm326 = vcmask 261120
    %v328 = vsel %vm326, %v306, 0
    %330 = vmatpush.bf16.msra.mxu0 0
    %331 = vmatpush.bf16.msra.mxu0 0
    %332 = vmatpush.bf16.msra.mxu0 0
    %333 = vmatpush.bf16.msra.mxu0 0
    %334 = vmatpush.bf16.msra.mxu0 0
    %335 = vmatpush.bf16.msra.mxu0 0
    %336 = vmatpush.bf16.msra.mxu0 %v320
    %337 = vmatpush.bf16.msra.mxu0 %v319
    %338 = vmatmul.bf16.gmra.mxu0 %v328
    %v339 = vpop.f32.mrf.mxu0
    %v340 = vadd.f32 %v324, %v339
    %v341 = vpop.f32.mrf.mxu0
    %342 = vdwg.mxu0
    %v343 = vmax.f32 %v340, 0.0
    %344 = vrot.lane.b32.xlu0 %v302, 80
    %v345 = vpop.permute.xlu0 %344
    %v347 = vmul.f32 %v343, %v345
    %v348 = vsel %vm205, %v347, 0.0
    %349 = vadd.xlane.f32.xlu0 %v348
    %v350 = vpop.xlane.xlu0 %349
    %v351 = vadd.f32 %v350, %v302
    %v352 = vxor.u32 %v351, 2147483648
    %v353 = vmul.f32 %v352, 1.442695
    %v354 = vpow.pop %v353
    %v355 = vadd.f32 %v354, 1.0
    %v356 = vrcp.pop %v355
    %v357 = vmul.f32 %v355, %v356
    %v358 = vsub.f32 1.0, %v357
    %v359 = vmul.f32 %v356, %v358
    %v360 = vadd.f32 %v356, %v359
    %vm361 = vweird.f32 %v355
    %vm362 = vweird.f32 %v356
    %vm363 = vmor %vm361, %vm362
    %v364 = vsel %vm363, %v356, %v360
    %v365 = vand.u32 2147483647, %v355
    %vm366 = vcmp.eq.f32.partialorder %v365, 8.507059e+37
    %v367 = vand.u32 %v355, 2147483648
    %v368 = vor.u32 1.1754944e-38, %v367
    %v369 = vsel %vm366, %v368, %v364
    %v370 = vmul.f32 1.0, %v369
    %372 = vrot.lane.b32.xlu0 %v370, 64
    %v373 = vpop.permute.xlu0 %372
    %vm375 = vcmask 7168
    %376 = vst.msk [vmem:[%s5] sm:$0xff] %vm375, %v373
    // Predicated region
    $region26: #{forward.1} parent=1 // pred_check
      _
    $region27: #{forward.1} parent=1 // pred_check_branch
      %378 = sbr.rel (0) target = $region29
    $region28: #{forward.1} parent=1 // pred_region
      _
    $region29: #{forward.1} parent=1 // pred_fallthru
      _
    // Predicated region
    $region30: #{forward.1} parent=1 // pred_check
      _
    $region31: #{forward.1} parent=1 // pred_check_branch
      %380 = sbr.rel (0) target = $region33
    $region32: #{forward.1} parent=1 // pred_region
      _
    $region33: #{forward.1} parent=1 // pred_fallthru
      _
    %381 = vsyncpa [#allocation4], 1

</llo_original>
